<compile_context>
chip_gen: v7x
topology: tpu7x:2x2x1
jax: 0.10.0
libtpu: 0.0.40
codegen_flags: <defaults>
</compile_context>

<pallas_src>
import jax
import jax.numpy as jnp
from jax.experimental import pallas as pl
from jax.experimental.pallas import tpu as pltpu

_LANE = 128
_SUBLANE = 8
_VMEM_BUDGET = 40 * 1024 * 1024  # conservative: leaves headroom on v7x (64 MiB)


def _round_up(x, m):
    return ((x + m - 1) // m) * m


def _make_ffnn_kernel(num_weights):
    """Kernel applying num_weights linear layers (weights pre-transposed to
    (in, out), bf16) with f32 tanh between all but the last layer."""
    # TODO(synk): Linear_MAP's `transform` argument is a weight-space closure;
    # only the identity transform (the default) is materialized here.

    def kernel(*refs):
        x_ref = refs[0]
        w_refs = refs[1:1 + num_weights]
        o_ref = refs[1 + num_weights]

        h = x_ref[...]  # bf16 input tile
        for idx, w_ref in enumerate(w_refs):
            # bf16 x bf16 -> f32 accumulation on the MXU.
            h = jnp.dot(h.astype(jnp.bfloat16), w_ref[...],
                        preferred_element_type=jnp.float32)
            if idx != num_weights - 1:
                h = jnp.tanh(h)  # f32 tanh (EUP); keep f32 for v5e
        o_ref[...] = h.astype(o_ref.dtype)

    return kernel


def ffnn_forward(x, weights, *, batch_tile=1024, out_dtype=jnp.float32):
    """Fused FFNN forward pass.

    x:        (B, input_size) float array
    weights:  list of (out_features, in_features) float32 arrays, PyTorch
              convention: [fci, h1, ..., h_{k-1}, fce] (single weight when
              hidden_num == 0).
    """
    n = len(weights)
    B, D = x.shape
    num_classes = weights[-1].shape[0]

    # ---- lane-aligned widths -------------------------------------------------
    d_pad = _round_up(D, _LANE)
    out_pads = [_round_up(w.shape[0], _LANE) for w in weights]
    in_pads = [d_pad] + out_pads[:-1]
    n_pad = out_pads[-1]

    # ---- weight prep: transpose to (in, out), cast bf16, zero-pad ------------
    weights_t = []
    for w, ip, op in zip(weights, in_pads, out_pads):
        wt = jnp.asarray(w, jnp.float32).T.astype(jnp.bfloat16)
        wt = jnp.pad(wt, ((0, ip - wt.shape[0]), (0, op - wt.shape[1])))
        weights_t.append(wt)

    # ---- batch tile from VMEM budget -----------------------------------------
    # At least 2 grid steps so the v7x megacore has work on both TensorCores.
    tb = min(batch_tile, max(_SUBLANE, _round_up(pl.cdiv(B, 2), _SUBLANE)))
    tb = _round_up(tb, _SUBLANE)

    w_bytes = sum(int(w.size) * 2 for w in weights_t)      # single-buffered bf16
    max_width = max([d_pad] + out_pads)
    out_itemsize = jnp.dtype(out_dtype).itemsize

    def footprint(t):
        return (2 * t * d_pad * 2                  # x tile, double-buffered bf16
                + 2 * t * n_pad * out_itemsize     # out tile, double-buffered
                + w_bytes                          # all weights, single-buffered
                + 2 * t * max_width * 4)           # live f32 intermediates

    while tb > _SUBLANE and footprint(tb) > _VMEM_BUDGET:
        tb = _round_up(tb // 2, _SUBLANE)

    b_pad = _round_up(B, tb)
    x_p = jnp.asarray(x).astype(jnp.bfloat16)
    x_p = jnp.pad(x_p, ((0, b_pad - B), (0, d_pad - D)))

    kernel = _make_ffnn_kernel(n)

    # x tiled along the batch; weights VMEM-resident (constant index_map,
    # single buffer).
    in_specs = [pl.BlockSpec((tb, d_pad), lambda i: (i, 0))]
    for w in weights_t:
        in_specs.append(
            pl.BlockSpec(w.shape, lambda i: (0, 0),
                         pipeline_mode=pl.Buffered(1)))
    out_spec = pl.BlockSpec((tb, n_pad), lambda i: (i, 0))

    vmem_limit = int(min(max(footprint(tb) * 1.25, 16 * 1024 * 1024),
                         60 * 1024 * 1024))

    out_padded = pl.pallas_call(
        kernel,
        out_shape=jax.ShapeDtypeStruct((b_pad, n_pad), out_dtype),
        grid=(b_pad // tb,),
        in_specs=in_specs,
        out_specs=out_spec,
        compiler_params=pltpu.CompilerParams(
            dimension_semantics=("parallel",),
            vmem_limit_bytes=vmem_limit),
    )(x_p, *weights_t)

    return out_padded[:B, :num_classes]


def ffnn_reference(x, weights):
    """Pure-JAX f32 reference mirroring PyTorch FFNN.forward."""
    h = x
    for idx, w in enumerate(weights):
        h = h @ w.T
        if idx != len(weights) - 1:
            h = jnp.tanh(h)
    return h


if __name__ == "__main__":
    # Small deterministic config consistent with FFNN.__init__:
    #   input_size=16, layers=[32, 32] (hidden_num=2), num_classes=4
    input_size = 16
    layers = [32, 32]
    num_classes = 4
    batch = 20  # deliberately not a multiple of 8 to exercise batch padding

    key = jax.random.PRNGKey(0)
    k_x, k0, k1, k2 = jax.random.split(key, 4)

    x = jax.random.normal(k_x, (batch, input_size), dtype=jnp.float32)

    # Deterministic weights in PyTorch (out_features, in_features) convention.
    w_fci = 0.3 * jax.random.normal(k0, (layers[0], input_size), dtype=jnp.float32)
    w_h1 = 0.3 * jax.random.normal(k1, (layers[1], layers[0]), dtype=jnp.float32)
    w_fce = 0.3 * jax.random.normal(k2, (num_classes, layers[1]), dtype=jnp.float32)
    weights = [w_fci, w_h1, w_fce]

    out = ffnn_forward(x, weights)
    out = jax.block_until_ready(out)

    ref = ffnn_reference(x, weights)
    assert out.shape == (batch, num_classes)
    # bf16 matmul inputs with f32 accumulation -> relaxed tolerance vs f32 ref.
    assert jnp.allclose(out, ref, atol=3e-2, rtol=3e-2), "mismatch vs reference"

    print("KERNEL_OK")
</pallas_src>

<mosaic_0001>
module attributes {stable_mosaic.version = 11 : i64} {
  func.func @kernel(%arg0: i32, %arg1: memref<16x128xbf16, #tpu.memory_space<vmem>>, %arg2: memref<128x128xbf16, #tpu.memory_space<vmem>>, %arg3: memref<128x128xbf16, #tpu.memory_space<vmem>>, %arg4: memref<128x128xbf16, #tpu.memory_space<vmem>>, %arg5: memref<16x128xf32, #tpu.memory_space<vmem>>) attributes {dimension_semantics = [#tpu.dimension_semantics<parallel>], iteration_bounds = array<i64: 2>, scalar_prefetch = 0 : i64, scratch_operands = 0 : i64, tpu.core_type = #tpu.core_type<tc>, window_params = [{transform_indices = @transform_0, window_bounds = array<i64: 16, 128>}, {pipeline_mode = #tpu.pipeline_mode<synchronous>, transform_indices = @transform_1, window_bounds = array<i64: 128, 128>}, {pipeline_mode = #tpu.pipeline_mode<synchronous>, transform_indices = @transform_2, window_bounds = array<i64: 128, 128>}, {pipeline_mode = #tpu.pipeline_mode<synchronous>, transform_indices = @transform_3, window_bounds = array<i64: 128, 128>}, {transform_indices = @transform_4, window_bounds = array<i64: 16, 128>}]} {
    %c0 = arith.constant 0 : index
    %c0_0 = arith.constant 0 : index
    %0 = vector.load %arg1[%c0, %c0_0] : memref<16x128xbf16, #tpu.memory_space<vmem>>, vector<16x128xbf16>
    %c0_1 = arith.constant 0 : index
    %c0_2 = arith.constant 0 : index
    %1 = vector.load %arg2[%c0_1, %c0_2] : memref<128x128xbf16, #tpu.memory_space<vmem>>, vector<128x128xbf16>
    %cst = arith.constant dense<0.000000e+00> : vector<16x128xf32>
    %2 = tpu.matmul %0, %1, %cst {dimension_numbers = #tpu.dot_dimension_numbers<[1], [0], [0], [1], [0, 0, 1, 1], [], []>} : vector<16x128xbf16>, vector<128x128xbf16>, vector<16x128xf32> -> vector<16x128xf32>
    %3 = math.tanh %2 : vector<16x128xf32>
    %4 = arith.truncf %3 : vector<16x128xf32> to vector<16x128xbf16>
    %c0_3 = arith.constant 0 : index
    %c0_4 = arith.constant 0 : index
    %5 = vector.load %arg3[%c0_3, %c0_4] : memref<128x128xbf16, #tpu.memory_space<vmem>>, vector<128x128xbf16>
    %cst_5 = arith.constant dense<0.000000e+00> : vector<16x128xf32>
    %6 = tpu.matmul %4, %5, %cst_5 {dimension_numbers = #tpu.dot_dimension_numbers<[1], [0], [0], [1], [0, 0, 1, 1], [], []>} : vector<16x128xbf16>, vector<128x128xbf16>, vector<16x128xf32> -> vector<16x128xf32>
    %7 = math.tanh %6 : vector<16x128xf32>
    %8 = arith.truncf %7 : vector<16x128xf32> to vector<16x128xbf16>
    %c0_6 = arith.constant 0 : index
    %c0_7 = arith.constant 0 : index
    %9 = vector.load %arg4[%c0_6, %c0_7] : memref<128x128xbf16, #tpu.memory_space<vmem>>, vector<128x128xbf16>
    %cst_8 = arith.constant dense<0.000000e+00> : vector<16x128xf32>
    %10 = tpu.matmul %8, %9, %cst_8 {dimension_numbers = #tpu.dot_dimension_numbers<[1], [0], [0], [1], [0, 0, 1, 1], [], []>} : vector<16x128xbf16>, vector<128x128xbf16>, vector<16x128xf32> -> vector<16x128xf32>
    %c0_9 = arith.constant 0 : index
    %c0_10 = arith.constant 0 : index
    %11 = vector.load %arg5[%c0_9, %c0_10] : memref<16x128xf32, #tpu.memory_space<vmem>>, vector<16x128xf32>
    tpu.vector_store %arg5[%c0_9, %c0_10], %10 {strides = array<i32>} : memref<16x128xf32, #tpu.memory_space<vmem>>, vector<16x128xf32>,
    return
  }
  func.func @transform_0(%arg0: i32) -> (i32, i32) {
    %c0_i32 = arith.constant 0 : i32
    %c0_i32_0 = arith.constant 0 : i32
    return %arg0, %c0_i32 : i32, i32
  }
  func.func @transform_1(%arg0: i32) -> (i32, i32) {
    %c0_i32 = arith.constant 0 : i32
    %c0_i32_0 = arith.constant 0 : i32
    %c0_i32_1 = arith.constant 0 : i32
    return %c0_i32, %c0_i32_0 : i32, i32
  }
  func.func @transform_2(%arg0: i32) -> (i32, i32) {
    %c0_i32 = arith.constant 0 : i32
    %c0_i32_0 = arith.constant 0 : i32
    %c0_i32_1 = arith.constant 0 : i32
    return %c0_i32, %c0_i32_0 : i32, i32
  }
  func.func @transform_3(%arg0: i32) -> (i32, i32) {
    %c0_i32 = arith.constant 0 : i32
    %c0_i32_0 = arith.constant 0 : i32
    %c0_i32_1 = arith.constant 0 : i32
    return %c0_i32, %c0_i32_0 : i32, i32
  }
  func.func @transform_4(%arg0: i32) -> (i32, i32) {
    %c0_i32 = arith.constant 0 : i32
    %c0_i32_0 = arith.constant 0 : i32
    return %arg0, %c0_i32 : i32, i32
  }
}

</mosaic_0001>

<llo_original>
// kernel: tpu_custom_call.1
$region0: #{tpu_custom_call.1}
  #allocation0 [shape = 'u32[]', space=smem, size = 0x4, offset = 0x4, fixed_abs, tag = 'smem constant byte address 0x4 - core index']
  #allocation1 [shape = 'u32[144,128]{1,0:T(1,128)}', space=vmem, size = 0x12000, scoped, tag = 'internal scratch']
  %s0 = inlined_call_operand.hbm [shape: bf16[32,128], index: 0, kind: input, shape index: {}]
  %s1 = inlined_call_operand.hbm [shape: bf16[128,128], index: 1, kind: input, shape index: {}]
  %s2 = inlined_call_operand.hbm [shape: bf16[128,128], index: 2, kind: input, shape index: {}]
  %s3 = inlined_call_operand.hbm [shape: bf16[128,128], index: 3, kind: input, shape index: {}]
  %s4 = inlined_call_operand.hbm [shape: f32[32,128], index: 4, kind: output, shape index: {}]
  %s5 = sld [smem:[#allocation0]]
  $region65: #{tpu_custom_call.1} parent=0
    _
  %s7 = ssub.s32 1, %s5
  %s8 = scalar_select 0, %s7, %s5
  $region1: #{tpu_custom_call.1} parent=0
    #allocation2 [shape = 'u8[8192]{0}', space=vmem, size = 0x2000, scoped, tag = 'input window, operand 0']
    #allocation3 [shape = 's32[2]{0}', space=sflag, size = 0x8, scoped, tag = 'scoped memory for tpu_custom_call.1']
    #allocation4 [shape = 's32[2]{0}', space=sflag, size = 0x8, scoped, tag = 'scoped memory for tpu_custom_call.1']
    #allocation5 [shape = 'u8[32768]{0}', space=vmem, size = 0x8000, scoped, tag = 'input window, operand 1, single buffered']
    #allocation6 [shape = 's32[1]{0}', space=sflag, size = 0x4, scoped, tag = 'scoped memory for tpu_custom_call.1']
    #allocation7 [shape = 'u8[32768]{0}', space=vmem, size = 0x8000, scoped, tag = 'input window, operand 2, single buffered']
    #allocation8 [shape = 'u8[32768]{0}', space=vmem, size = 0x8000, scoped, tag = 'input window, operand 3, single buffered']
    #allocation9 [shape = 's32[1]{0}', space=sflag, size = 0x4, scoped, tag = 'scoped memory for tpu_custom_call.1']
    #allocation10 [shape = 'u8[16384]{0}', space=vmem, size = 0x4000, scoped, tag = 'output window, operand 0']
    %9 = vsyncpa [#allocation3], 0
    %s10 = scalar_lea.sflag [#allocation3], 1
    %11 = vsyncpa %s10, 0
    %12 = vsyncpa [#allocation6], 0
    %13 = vsyncpa [#allocation9], 0
    %14 = vsyncpa [#allocation4], 0
    %s15 = scalar_lea.sflag [#allocation4], 1
    %16 = vsyncpa %s15, 0
    loop: start=0, step=1, limit=4
    $region2: #{tpu_custom_call.1} parent=1 // loop_pre_header
      _
    $region3: #{tpu_custom_call.1} parent=1 // loop_header
      %s18 = sphi 0, %s22
      %p19 = scmp.ge.s32.totalorder %s18, 4
      %s28 = sphi 0, %s30
      %s31 = sphi 0, %s28
      %s32 = sphi 0, %s31
      %s48 = sphi 0, %s32
      %s52 = sphi 0, %s52
      %s54 = sphi 0, %s52
      %s55 = sphi 0, %s54
      %s69 = sphi 0, %s55
      %s73 = sphi 0, %s73
      %s75 = sphi 0, %s73
      %s76 = sphi 0, %s75
      %s90 = sphi 0, %s76
      %s94 = sphi 0, %s94
      %s96 = sphi 0, %s94
      %s97 = sphi 0, %s96
      %s111 = sphi 0, %s97
      %s117 = sphi 0, %s119
      %s120 = sphi 0, %s117
      %s121 = sphi 0, %s120
      %s137 = sphi 0, %s121
    $region4: #{tpu_custom_call.1} parent=1 // loop_header_branch
      %21 = sbr.rel (%p19) target = $region8
    $region5: #{tpu_custom_call.1} parent=1 // loop_body
      %s23 = ssub.s32 %s18, 1
      %s24 = ssub.s32 %s18, 2
      %s25 = sadd.s32 %s18, 1
      %s26 = ssub.s32 %s18, %s25
      %p27 = scmp.eq.s32.totalorder %s26, 0
      %s29 = sadd.s32 %s28, 1
      %s30 = scalar_select %p27, %s28, %s29
      %p33 = pneg %p27
      %p34 = scmp.eq.s32.totalorder %s18, 1
      %p35 = por %p33, %p34
      %p36 = scmp.ne.s32.totalorder %s28, %s31
      %p37 = scmp.eq.s32.totalorder %s18, 0
      %p38 = por %p36, %p37
      %p39 = scmp.ne.s32.totalorder %s28, %s31
      %p40 = scmp.eq.s32.totalorder %s23, 1
      %p41 = por %p39, %p40
      %p42 = scmp.ne.s32.totalorder %s31, %s32
      %p43 = scmp.eq.s32.totalorder %s23, 0
      %p44 = por %p42, %p43
      %p45 = scmp.ne.s32.totalorder %s31, %s32
      %p46 = scmp.eq.s32.totalorder %s24, 1
      %p47 = por %p45, %p46
      %p49 = scmp.ne.s32.totalorder %s32, %s48
      %p50 = scmp.eq.s32.totalorder %s24, 0
      %p51 = por %p49, %p50
      %s53 = sadd.s32 %s52, 1
      %p56 = scmp.eq.s32.totalorder %s18, 1
      %p57 = scmp.ne.s32.totalorder %s52, %s54
      %p58 = scmp.eq.s32.totalorder %s18, 0
      %p59 = por %p57, %p58
      %p60 = scmp.ne.s32.totalorder %s52, %s54
      %p61 = scmp.eq.s32.totalorder %s23, 1
      %p62 = por %p60, %p61
      %p63 = scmp.ne.s32.totalorder %s54, %s55
      %p64 = scmp.eq.s32.totalorder %s23, 0
      %p65 = por %p63, %p64
      %p66 = scmp.ne.s32.totalorder %s54, %s55
      %p67 = scmp.eq.s32.totalorder %s24, 1
      %p68 = por %p66, %p67
      %p70 = scmp.ne.s32.totalorder %s55, %s69
      %p71 = scmp.eq.s32.totalorder %s24, 0
      %p72 = por %p70, %p71
      %s74 = sadd.s32 %s73, 1
      %p77 = scmp.eq.s32.totalorder %s18, 1
      %p78 = scmp.ne.s32.totalorder %s73, %s75
      %p79 = scmp.eq.s32.totalorder %s18, 0
      %p80 = por %p78, %p79
      %p81 = scmp.ne.s32.totalorder %s73, %s75
      %p82 = scmp.eq.s32.totalorder %s23, 1
      %p83 = por %p81, %p82
      %p84 = scmp.ne.s32.totalorder %s75, %s76
      %p85 = scmp.eq.s32.totalorder %s23, 0
      %p86 = por %p84, %p85
      %p87 = scmp.ne.s32.totalorder %s75, %s76
      %p88 = scmp.eq.s32.totalorder %s24, 1
      %p89 = por %p87, %p88
      %p91 = scmp.ne.s32.totalorder %s76, %s90
      %p92 = scmp.eq.s32.totalorder %s24, 0
      %p93 = por %p91, %p92
      %s95 = sadd.s32 %s94, 1
      %p98 = scmp.eq.s32.totalorder %s18, 1
      %p99 = scmp.ne.s32.totalorder %s94, %s96
      %p100 = scmp.eq.s32.totalorder %s18, 0
      %p101 = por %p99, %p100
      %p102 = scmp.ne.s32.totalorder %s94, %s96
      %p103 = scmp.eq.s32.totalorder %s23, 1
      %p104 = por %p102, %p103
      %p105 = scmp.ne.s32.totalorder %s96, %s97
      %p106 = scmp.eq.s32.totalorder %s23, 0
      %p107 = por %p105, %p106
      %p108 = scmp.ne.s32.totalorder %s96, %s97
      %p109 = scmp.eq.s32.totalorder %s24, 1
      %p110 = por %p108, %p109
      %p112 = scmp.ne.s32.totalorder %s97, %s111
      %p113 = scmp.eq.s32.totalorder %s24, 0
      %p114 = por %p112, %p113
      %s115 = ssub.s32 %s18, %s25
      %p116 = scmp.eq.s32.totalorder %s115, 0
      %s118 = sadd.s32 %s117, 1
      %s119 = scalar_select %p116, %s117, %s118
      %p122 = pneg %p116
      %p123 = scmp.eq.s32.totalorder %s18, 1
      %p124 = por %p122, %p123
      %p125 = scmp.ne.s32.totalorder %s117, %s120
      %p126 = scmp.eq.s32.totalorder %s18, 0
      %p127 = por %p125, %p126
      %p128 = scmp.ne.s32.totalorder %s117, %s120
      %p129 = scmp.eq.s32.totalorder %s23, 1
      %p130 = por %p128, %p129
      %p131 = scmp.ne.s32.totalorder %s120, %s121
      %p132 = scmp.eq.s32.totalorder %s23, 0
      %p133 = por %p131, %p132
      %p134 = scmp.ne.s32.totalorder %s120, %s121
      %p135 = scmp.eq.s32.totalorder %s24, 1
      %p136 = por %p134, %p135
      %p138 = scmp.ne.s32.totalorder %s121, %s137
      %p139 = scmp.eq.s32.totalorder %s24, 0
      %p140 = por %p138, %p139
      %p141 = scmp.le.s32.totalorder 1, %s18
      %p142 = scmp.lt.s32.totalorder %s18, 3
      %p143 = pnand %p141, %p142
      %p144 = pneg %p143
      // Predicated region
      $region9: #{tpu_custom_call.1} parent=5 // pred_check
        _
      $region10: #{tpu_custom_call.1} parent=5 // pred_check_branch
        %146 = sbr.rel (%p143) target = $region12
      $region11: #{tpu_custom_call.1} parent=5 // pred_region
        %s147 = ssub.s32 %s18, 1
        // Predicated region
        $region13: #{tpu_custom_call.1} parent=11 // pred_check
          %p148 = pneg %p65
        $region14: #{tpu_custom_call.1} parent=11 // pred_check_branch
          %150 = sbr.rel (%p148) target = $region16
        $region15: #{tpu_custom_call.1} parent=11 // pred_region
          %s152 = ssub.s32 1024, 1024
          %153 = vsyncadd [#allocation6], %s152
          %s154 = sshll.u32 [#allocation5], 4
          %s155 = int_to_ptr.vmem [resolvable:$true] %s154
          %160 = dma.hbm_to_vmem [thread:$0]  %s1, 1024, %s155, [#allocation6], 64, 64, 4
        $region16: #{tpu_custom_call.1} parent=11 // pred_fallthru
          _
        // Predicated region
        $region17: #{tpu_custom_call.1} parent=11 // pred_check
          %p161 = pneg %p86
        $region18: #{tpu_custom_call.1} parent=11 // pred_check_branch
          %163 = sbr.rel (%p161) target = $region20
        $region19: #{tpu_custom_call.1} parent=11 // pred_region
          %s165 = ssub.s32 1024, 1024
          %166 = vsyncadd [#allocation6], %s165
          %s167 = sshll.u32 [#allocation7], 4
          %s168 = int_to_ptr.vmem [resolvable:$true] %s167
          %173 = dma.hbm_to_vmem [thread:$0]  %s2, 1024, %s168, [#allocation6], 64, 64, 4
        $region20: #{tpu_custom_call.1} parent=11 // pred_fallthru
          _
        // Predicated region
        $region21: #{tpu_custom_call.1} parent=11 // pred_check
          %p174 = pneg %p107
        $region22: #{tpu_custom_call.1} parent=11 // pred_check_branch
          %176 = sbr.rel (%p174) target = $region24
        $region23: #{tpu_custom_call.1} parent=11 // pred_region
          %s178 = ssub.s32 1024, 1024
          %179 = vsyncadd [#allocation9], %s178
          %s180 = sshll.u32 [#allocation8], 4
          %s181 = int_to_ptr.vmem [resolvable:$true] %s180
          %186 = dma.hbm_to_vmem [thread:$0]  %s3, 1024, %s181, [#allocation9], 64, 64, 4
        $region24: #{tpu_custom_call.1} parent=11 // pred_fallthru
          _
      $region12: #{tpu_custom_call.1} parent=5 // pred_fallthru
        _
      %p187 = scmp.lt.s32.totalorder %s18, 2
      // Predicated region
      $region25: #{tpu_custom_call.1} parent=5 // pred_check
        %p188 = pneg %p187
      $region26: #{tpu_custom_call.1} parent=5 // pred_check_branch
        %190 = sbr.rel (%p188) target = $region28
      $region27: #{tpu_custom_call.1} parent=5 // pred_region
        // Predicated region
        $region29: #{tpu_custom_call.1} parent=27 // pred_check
          %p191 = pneg %p38
        $region30: #{tpu_custom_call.1} parent=27 // pred_check_branch
          %193 = sbr.rel (%p191) target = $region32
        $region31: #{tpu_custom_call.1} parent=27 // pred_region
          %s194 = sand.u32 %s28, 1
          %s195 = scalar_lea.sflag [#allocation3], %s194
          %s196 = sand.u32 %s28, 1
          %s197 = smul.addr %s196, 8
          %s198 = scalar_lea.vmem [#allocation2], %s197
          %s199 = smul.u32 2, %s18
          %s201 = ssub.s32 128, 128
          %202 = vsyncadd %s195, %s201
          %s203 = smul.addr %s199, 64
          %s204 = scalar_lea.hbm %s0, %s203
          %s205 = sshll.u32 %s198, 4
          %s206 = int_to_ptr.vmem [resolvable:$true] %s205
          %211 = dma.hbm_to_vmem [thread:$0]  %s204, 128, %s206, %s195, 64, 64, 4
        $region32: #{tpu_custom_call.1} parent=27 // pred_fallthru
          _
      $region28: #{tpu_custom_call.1} parent=5 // pred_fallthru
        _
      %p212 = scmp.le.s32.totalorder 1, %s18
      %p213 = scmp.lt.s32.totalorder %s18, 3
      %p214 = pnand %p212, %p213
      %p215 = pneg %p214
      // Predicated region
      $region33: #{tpu_custom_call.1} parent=5 // pred_check
        _
      $region34: #{tpu_custom_call.1} parent=5 // pred_check_branch
        %217 = sbr.rel (%p214) target = $region36
      $region35: #{tpu_custom_call.1} parent=5 // pred_region
        %s218 = ssub.s32 %s18, 1
        %s219 = sand.u32 %s31, 1
        %s220 = scalar_lea.sflag [#allocation3], %s219
        %s221 = sand.u32 %s31, 1
        %s222 = smul.addr %s221, 8
        %s223 = scalar_lea.vmem [#allocation2], %s222
        // Predicated region
        $region37: #{tpu_custom_call.1} parent=35 // pred_check
          %p224 = pneg %p44
        $region38: #{tpu_custom_call.1} parent=35 // pred_check_branch
          %226 = sbr.rel (%p224) target = $region40
        $region39: #{tpu_custom_call.1} parent=35 // pred_region
          %227 = dma.done %s220, 128
        $region40: #{tpu_custom_call.1} parent=35 // pred_fallthru
          _
        // Predicated region
        $region41: #{tpu_custom_call.1} parent=35 // pred_check
          %p228 = pneg %p65
        $region42: #{tpu_custom_call.1} parent=35 // pred_check_branch
          %230 = sbr.rel (%p228) target = $region44
        $region43: #{tpu_custom_call.1} parent=35 // pred_region
          %231 = dma.done [#allocation6], 1024
        $region44: #{tpu_custom_call.1} parent=35 // pred_fallthru
          _
        // Predicated region
        $region45: #{tpu_custom_call.1} parent=35 // pred_check
          %p232 = pneg %p86
        $region46: #{tpu_custom_call.1} parent=35 // pred_check_branch
          %234 = sbr.rel (%p232) target = $region48
        $region47: #{tpu_custom_call.1} parent=35 // pred_region
          %235 = dma.done [#allocation6], 1024
        $region48: #{tpu_custom_call.1} parent=35 // pred_fallthru
          _
        // Predicated region
        $region49: #{tpu_custom_call.1} parent=35 // pred_check
          %p236 = pneg %p107
        $region50: #{tpu_custom_call.1} parent=35 // pred_check_branch
          %238 = sbr.rel (%p236) target = $region52
        $region51: #{tpu_custom_call.1} parent=35 // pred_region
          %239 = dma.done [#allocation9], 1024
        $region52: #{tpu_custom_call.1} parent=35 // pred_fallthru
          _
        %s240 = sand.u32 %s31, 1
        %s241 = scalar_lea.sflag [#allocation3], %s240
        %s242 = sand.u32 %s31, 1
        %s243 = smul.addr %s242, 8
        %s244 = scalar_lea.vmem [#allocation2], %s243
        %p245 = pneg %p44
        %p246 = pneg %p41
        %p247 = pneg %p65
        %p248 = pneg %p62
        %p249 = pneg %p86
        %p250 = pneg %p83
        %p251 = pneg %p107
        %p252 = pneg %p104
        %p253 = pneg %p133
        %p254 = pneg %p130
        %s255 = sand.u32 %s120, 1
        %s256 = scalar_lea.sflag [#allocation4], %s255
        %s257 = sand.u32 %s120, 1
        %s258 = smul.addr %s257, 16
        %s259 = scalar_lea.vmem [#allocation10], %s258
        %s260 = smul.u32 2, %s23
        %s261 = smul.u32 2, %s23
        %v263 = vld [vmem:[%s223] sm:$0xf]
        %v264 = vld [vmem:[%s223 + $0x4] sm:$0xf]
        %v265 = vld [vmem:[#allocation5] sm:$0xf]
        %v266 = vld [vmem:[#allocation5 + $0x4] sm:$0xf]
        %v267 = vld [vmem:[#allocation5 + $0x8] sm:$0xf]
        %v268 = vld [vmem:[#allocation5 + $0xc] sm:$0xf]
        %v269 = vld [vmem:[#allocation5 + $0x10] sm:$0xf]
        %v270 = vld [vmem:[#allocation5 + $0x14] sm:$0xf]
        %v271 = vld [vmem:[#allocation5 + $0x18] sm:$0xf]
        %v272 = vld [vmem:[#allocation5 + $0x1c] sm:$0xf]
        %v273 = vld [vmem:[#allocation5 + $0x20] sm:$0xf]
        %v274 = vld [vmem:[#allocation5 + $0x24] sm:$0xf]
        %v275 = vld [vmem:[#allocation5 + $0x28] sm:$0xf]
        %v276 = vld [vmem:[#allocation5 + $0x2c] sm:$0xf]
        %v277 = vld [vmem:[#allocation5 + $0x30] sm:$0xf]
        %v278 = vld [vmem:[#allocation5 + $0x34] sm:$0xf]
        %v279 = vld [vmem:[#allocation5 + $0x38] sm:$0xf]
        %v280 = vld [vmem:[#allocation5 + $0x3c] sm:$0xf]
        %v283 = vunpack.c.l.b16 %v263
        %v284 = vunpack.c.l.b16 %v264
        %v285 = vpack.c.b16 %v284, %v283
        %v303 = vunpack.c.l.b16 %v265
        %v304 = vunpack.c.l.b16 %v266
        %v305 = vunpack.c.l.b16 %v267
        %v306 = vunpack.c.l.b16 %v268
        %v307 = vunpack.c.l.b16 %v269
        %v308 = vunpack.c.l.b16 %v270
        %v309 = vunpack.c.l.b16 %v271
        %v310 = vunpack.c.l.b16 %v272
        %v311 = vunpack.c.l.b16 %v273
        %v312 = vunpack.c.l.b16 %v274
        %v313 = vunpack.c.l.b16 %v275
        %v314 = vunpack.c.l.b16 %v276
        %v315 = vunpack.c.l.b16 %v277
        %v316 = vunpack.c.l.b16 %v278
        %v317 = vunpack.c.l.b16 %v279
        %v318 = vunpack.c.l.b16 %v280
        %v319 = vpack.c.b16 %v304, %v303
        %v320 = vpack.c.b16 %v306, %v305
        %v321 = vpack.c.b16 %v308, %v307
        %v322 = vpack.c.b16 %v310, %v309
        %v323 = vpack.c.b16 %v312, %v311
        %v324 = vpack.c.b16 %v314, %v313
        %v325 = vpack.c.b16 %v316, %v315
        %v326 = vpack.c.b16 %v318, %v317
        %335 = vmatprep.subr.bf16.mxu0 0
        %336 = vmatpush1.bf16.msra.mxu0 %v319
        %337 = vmatprep.subr.bf16.mxu0 0
        %338 = vmatpush1.bf16.msra.mxu0 %v320
        %339 = vmatprep.subr.bf16.mxu0 0
        %340 = vmatpush1.bf16.msra.mxu0 %v321
        %341 = vmatprep.subr.bf16.mxu0 0
        %342 = vmatpush1.bf16.msra.mxu0 %v322
        %343 = vmatprep.subr.bf16.mxu0 0
        %344 = vmatpush1.bf16.msra.mxu0 %v323
        %345 = vmatprep.subr.bf16.mxu0 0
        %346 = vmatpush1.bf16.msra.mxu0 %v324
        %347 = vmatprep.subr.bf16.mxu0 0
        %348 = vmatpush1.bf16.msra.mxu0 %v325
        %349 = vmatprep.subr.bf16.mxu0 0
        %350 = vmatpush1.bf16.msra.mxu0 %v326
        %351 = vmatprep.subr.bf16.mxu0 0
        %352 = vmatpush1.bf16.msra.mxu0 0
        %353 = vmatprep.subr.bf16.mxu0 0
        %354 = vmatpush1.bf16.msra.mxu0 0
        %355 = vmatprep.subr.bf16.mxu0 0
        %356 = vmatpush1.bf16.msra.mxu0 0
        %357 = vmatprep.subr.bf16.mxu0 0
        %358 = vmatpush1.bf16.msra.mxu0 0
        %359 = vmatprep.subr.bf16.mxu0 0
        %360 = vmatpush1.bf16.msra.mxu0 0
        %361 = vmatprep.subr.bf16.mxu0 0
        %362 = vmatpush1.bf16.msra.mxu0 0
        %363 = vmatprep.subr.bf16.mxu0 0
        %364 = vmatpush1.bf16.msra.mxu0 0
        %365 = vmatprep.subr.bf16.mxu0 0
        %366 = vmatpush1.bf16.msra.mxu0 0
        %367 = vmatprep.mubr.bf16.mxu0 0
        %368 = vmatmul.mubr.bf16.gmra.mrb[0].mxu0 %v285
        %v369 = vpop.f32.mrb[0].mxu0
        %v370 = vadd.f32 0.0, %v369
        %v371 = vpop.f32.mrb[0].mxu0
        %v372 = vpop.f32.mrb[0].mxu0
        %v373 = vadd.f32 0.0, %v372
        %v374 = vpop.f32.mrb[0].mxu0
        %375 = vdwg.mxu0
        %v376 = vtanh.pop %v370
        %v377 = vtanh.pop %v373
        %v378 = vpack.c.bf16 %v377, %v376
        %v379 = vld [vmem:[#allocation7] sm:$0xf]
        %v380 = vld [vmem:[#allocation7 + $0x4] sm:$0xf]
        %v381 = vld [vmem:[#allocation7 + $0x8] sm:$0xf]
        %v382 = vld [vmem:[#allocation7 + $0xc] sm:$0xf]
        %v383 = vld [vmem:[#allocation7 + $0x10] sm:$0xf]
        %v384 = vld [vmem:[#allocation7 + $0x14] sm:$0xf]
        %v385 = vld [vmem:[#allocation7 + $0x18] sm:$0xf]
        %v386 = vld [vmem:[#allocation7 + $0x1c] sm:$0xf]
        %v387 = vld [vmem:[#allocation7 + $0x20] sm:$0xf]
        %v388 = vld [vmem:[#allocation7 + $0x24] sm:$0xf]
        %v389 = vld [vmem:[#allocation7 + $0x28] sm:$0xf]
        %v390 = vld [vmem:[#allocation7 + $0x2c] sm:$0xf]
        %v391 = vld [vmem:[#allocation7 + $0x30] sm:$0xf]
        %v392 = vld [vmem:[#allocation7 + $0x34] sm:$0xf]
        %v393 = vld [vmem:[#allocation7 + $0x38] sm:$0xf]
        %v394 = vld [vmem:[#allocation7 + $0x3c] sm:$0xf]
        %v411 = vunpack.c.l.b16 %v379
        %v412 = vunpack.c.l.b16 %v380
        %v413 = vunpack.c.l.b16 %v381
        %v414 = vunpack.c.l.b16 %v382
        %v415 = vunpack.c.l.b16 %v383
        %v416 = vunpack.c.l.b16 %v384
        %v417 = vunpack.c.l.b16 %v385
        %v418 = vunpack.c.l.b16 %v386
        %v419 = vunpack.c.l.b16 %v387
        %v420 = vunpack.c.l.b16 %v388
        %v421 = vunpack.c.l.b16 %v389
        %v422 = vunpack.c.l.b16 %v390
        %v423 = vunpack.c.l.b16 %v391
        %v424 = vunpack.c.l.b16 %v392
        %v425 = vunpack.c.l.b16 %v393
        %v426 = vunpack.c.l.b16 %v394
        %v427 = vpack.c.b16 %v412, %v411
        %v428 = vpack.c.b16 %v414, %v413
        %v429 = vpack.c.b16 %v416, %v415
        %v430 = vpack.c.b16 %v418, %v417
        %v431 = vpack.c.b16 %v420, %v419
        %v432 = vpack.c.b16 %v422, %v421
        %v433 = vpack.c.b16 %v424, %v423
        %v434 = vpack.c.b16 %v426, %v425
        %443 = vmatprep.subr.bf16.mxu0 0
        %444 = vmatpush1.bf16.msra.mxu0 %v427
        %445 = vmatprep.subr.bf16.mxu0 0
        %446 = vmatpush1.bf16.msra.mxu0 %v428
        %447 = vmatprep.subr.bf16.mxu0 0
        %448 = vmatpush1.bf16.msra.mxu0 %v429
        %449 = vmatprep.subr.bf16.mxu0 0
        %450 = vmatpush1.bf16.msra.mxu0 %v430
        %451 = vmatprep.subr.bf16.mxu0 0
        %452 = vmatpush1.bf16.msra.mxu0 %v431
        %453 = vmatprep.subr.bf16.mxu0 0
        %454 = vmatpush1.bf16.msra.mxu0 %v432
        %455 = vmatprep.subr.bf16.mxu0 0
        %456 = vmatpush1.bf16.msra.mxu0 %v433
        %457 = vmatprep.subr.bf16.mxu0 0
        %458 = vmatpush1.bf16.msra.mxu0 %v434
        %459 = vmatprep.subr.bf16.mxu0 0
        %460 = vmatpush1.bf16.msra.mxu0 0
        %461 = vmatprep.subr.bf16.mxu0 0
        %462 = vmatpush1.bf16.msra.mxu0 0
        %463 = vmatprep.subr.bf16.mxu0 0
        %464 = vmatpush1.bf16.msra.mxu0 0
        %465 = vmatprep.subr.bf16.mxu0 0
        %466 = vmatpush1.bf16.msra.mxu0 0
        %467 = vmatprep.subr.bf16.mxu0 0
        %468 = vmatpush1.bf16.msra.mxu0 0
        %469 = vmatprep.subr.bf16.mxu0 0
        %470 = vmatpush1.bf16.msra.mxu0 0
        %471 = vmatprep.subr.bf16.mxu0 0
        %472 = vmatpush1.bf16.msra.mxu0 0
        %473 = vmatprep.subr.bf16.mxu0 0
        %474 = vmatpush1.bf16.msra.mxu0 0
        %475 = vmatprep.mubr.bf16.mxu0 0
        %476 = vmatmul.mubr.bf16.gmra.mrb[0].mxu0 %v378
        %v477 = vpop.f32.mrb[0].mxu0
        %v478 = vadd.f32 0.0, %v477
        %v479 = vpop.f32.mrb[0].mxu0
        %v480 = vpop.f32.mrb[0].mxu0
        %v481 = vadd.f32 0.0, %v480
        %v482 = vpop.f32.mrb[0].mxu0
        %483 = vdwg.mxu0
        %v484 = vtanh.pop %v478
        %v485 = vtanh.pop %v481
        %v486 = vpack.c.bf16 %v485, %v484
        %v487 = vld [vmem:[#allocation8] sm:$0xf]
        %v488 = vld [vmem:[#allocation8 + $0x4] sm:$0xf]
        %v489 = vld [vmem:[#allocation8 + $0x8] sm:$0xf]
        %v490 = vld [vmem:[#allocation8 + $0xc] sm:$0xf]
        %v491 = vld [vmem:[#allocation8 + $0x10] sm:$0xf]
        %v492 = vld [vmem:[#allocation8 + $0x14] sm:$0xf]
        %v493 = vld [vmem:[#allocation8 + $0x18] sm:$0xf]
        %v494 = vld [vmem:[#allocation8 + $0x1c] sm:$0xf]
        %v495 = vld [vmem:[#allocation8 + $0x20] sm:$0xf]
        %v496 = vld [vmem:[#allocation8 + $0x24] sm:$0xf]
        %v497 = vld [vmem:[#allocation8 + $0x28] sm:$0xf]
        %v498 = vld [vmem:[#allocation8 + $0x2c] sm:$0xf]
        %v499 = vld [vmem:[#allocation8 + $0x30] sm:$0xf]
        %v500 = vld [vmem:[#allocation8 + $0x34] sm:$0xf]
        %v501 = vld [vmem:[#allocation8 + $0x38] sm:$0xf]
        %v502 = vld [vmem:[#allocation8 + $0x3c] sm:$0xf]
        %v519 = vunpack.c.l.b16 %v487
        %v520 = vunpack.c.l.b16 %v488
        %v521 = vunpack.c.l.b16 %v489
        %v522 = vunpack.c.l.b16 %v490
        %v523 = vunpack.c.l.b16 %v491
        %v524 = vunpack.c.l.b16 %v492
        %v525 = vunpack.c.l.b16 %v493
        %v526 = vunpack.c.l.b16 %v494
        %v527 = vunpack.c.l.b16 %v495
        %v528 = vunpack.c.l.b16 %v496
        %v529 = vunpack.c.l.b16 %v497
        %v530 = vunpack.c.l.b16 %v498
        %v531 = vunpack.c.l.b16 %v499
        %v532 = vunpack.c.l.b16 %v500
        %v533 = vunpack.c.l.b16 %v501
        %v534 = vunpack.c.l.b16 %v502
        %v535 = vpack.c.b16 %v520, %v519
        %v536 = vpack.c.b16 %v522, %v521
        %v537 = vpack.c.b16 %v524, %v523
        %v538 = vpack.c.b16 %v526, %v525
        %v539 = vpack.c.b16 %v528, %v527
        %v540 = vpack.c.b16 %v530, %v529
        %v541 = vpack.c.b16 %v532, %v531
        %v542 = vpack.c.b16 %v534, %v533
        %551 = vmatprep.subr.bf16.mxu0 0
        %552 = vmatpush1.bf16.msra.mxu0 %v535
        %553 = vmatprep.subr.bf16.mxu0 0
        %554 = vmatpush1.bf16.msra.mxu0 %v536
        %555 = vmatprep.subr.bf16.mxu0 0
        %556 = vmatpush1.bf16.msra.mxu0 %v537
        %557 = vmatprep.subr.bf16.mxu0 0
        %558 = vmatpush1.bf16.msra.mxu0 %v538
        %559 = vmatprep.subr.bf16.mxu0 0
        %560 = vmatpush1.bf16.msra.mxu0 %v539
        %561 = vmatprep.subr.bf16.mxu0 0
        %562 = vmatpush1.bf16.msra.mxu0 %v540
        %563 = vmatprep.subr.bf16.mxu0 0
        %564 = vmatpush1.bf16.msra.mxu0 %v541
        %565 = vmatprep.subr.bf16.mxu0 0
        %566 = vmatpush1.bf16.msra.mxu0 %v542
        %567 = vmatprep.subr.bf16.mxu0 0
        %568 = vmatpush1.bf16.msra.mxu0 0
        %569 = vmatprep.subr.bf16.mxu0 0
        %570 = vmatpush1.bf16.msra.mxu0 0
        %571 = vmatprep.subr.bf16.mxu0 0
        %572 = vmatpush1.bf16.msra.mxu0 0
        %573 = vmatprep.subr.bf16.mxu0 0
        %574 = vmatpush1.bf16.msra.mxu0 0
        %575 = vmatprep.subr.bf16.mxu0 0
        %576 = vmatpush1.bf16.msra.mxu0 0
        %577 = vmatprep.subr.bf16.mxu0 0
        %578 = vmatpush1.bf16.msra.mxu0 0
        %579 = vmatprep.subr.bf16.mxu0 0
        %580 = vmatpush1.bf16.msra.mxu0 0
        %581 = vmatprep.subr.bf16.mxu0 0
        %582 = vmatpush1.bf16.msra.mxu0 0
        %583 = vmatprep.mubr.bf16.mxu0 0
        %584 = vmatmul.mubr.bf16.gmra.mrb[0].mxu0 %v486
        %v585 = vpop.f32.mrb[0].mxu0
        %v586 = vadd.f32 0.0, %v585
        %v587 = vpop.f32.mrb[0].mxu0
        %v588 = vpop.f32.mrb[0].mxu0
        %v589 = vadd.f32 0.0, %v588
        %v590 = vpop.f32.mrb[0].mxu0
        %591 = vdwg.mxu0
        %592 = vst [vmem:[%s259] sm:$0xff] %v586
        %593 = vst [vmem:[%s259 + $0x8] sm:$0xff] %v589
        %s594 = sand.u32 %s120, 1
        %s595 = scalar_lea.sflag [#allocation4], %s594
        %s596 = sand.u32 %s120, 1
        %s597 = smul.addr %s596, 16
        %s598 = scalar_lea.vmem [#allocation10], %s597
        // Predicated region
        $region53: #{tpu_custom_call.1} parent=35 // pred_check
          %p599 = pneg %p130
        $region54: #{tpu_custom_call.1} parent=35 // pred_check_branch
          %601 = sbr.rel (%p599) target = $region56
        $region55: #{tpu_custom_call.1} parent=35 // pred_region
          %s602 = smul.u32 2, %s23
          %s604 = ssub.s32 256, 256
          %605 = vsyncadd %s595, %s604
          %s606 = smul.addr %s602, 128
          %s607 = scalar_lea.hbm %s4, %s606
          %s608 = sshll.u32 %s598, 4
          %s609 = int_to_ptr.vmem [resolvable:$true] %s608
          %614 = dma.vmem_to_hbm [thread:$0]  %s609, 256, %s607, %s595, 128, 128, 8
        $region56: #{tpu_custom_call.1} parent=35 // pred_fallthru
          _
      $region36: #{tpu_custom_call.1} parent=5 // pred_fallthru
        _
      %p615 = scmp.le.s32.totalorder 2, %s18
      // Predicated region
      $region57: #{tpu_custom_call.1} parent=5 // pred_check
        %p616 = pneg %p615
      $region58: #{tpu_custom_call.1} parent=5 // pred_check_branch
        %618 = sbr.rel (%p616) target = $region60
      $region59: #{tpu_custom_call.1} parent=5 // pred_region
        %s619 = ssub.s32 %s18, 2
        // Predicated region
        $region61: #{tpu_custom_call.1} parent=59 // pred_check
          %p620 = pneg %p136
        $region62: #{tpu_custom_call.1} parent=59 // pred_check_branch
          %622 = sbr.rel (%p620) target = $region64
        $region63: #{tpu_custom_call.1} parent=59 // pred_region
          %s623 = sand.u32 %s121, 1
          %s624 = scalar_lea.sflag [#allocation4], %s623
          %s625 = sand.u32 %s121, 1
          %s626 = smul.addr %s625, 16
          %s627 = scalar_lea.vmem [#allocation10], %s626
          %628 = dma.done %s624, 256
        $region64: #{tpu_custom_call.1} parent=59 // pred_fallthru
          _
      $region60: #{tpu_custom_call.1} parent=5 // pred_fallthru
        _
    $region6: #{tpu_custom_call.1} parent=1 // loop_footer
      %s22 = sadd.s32 1, %s18
    $region7: #{tpu_custom_call.1} parent=1 // loop_footer_branch
      %17 = sbr.rel target = $region3
    $region8: #{tpu_custom_call.1} parent=1 // loop_exit
      _
    %629 = vsyncpa [#allocation3], 1
    %s630 = scalar_lea.sflag [#allocation3], 1
    %631 = vsyncpa %s630, 1
    %632 = vsyncpa [#allocation6], 1
    %633 = vsyncpa [#allocation9], 1
    %634 = vsyncpa [#allocation4], 1
    %s635 = scalar_lea.sflag [#allocation4], 1
    %636 = vsyncpa %s635, 1

</llo_original>
